<compile_context>
chip_gen: v6e
topology: v6e:2x2x1
jax: 0.10.0
libtpu: 0.0.40
codegen_flags: <defaults>
</compile_context>

<pallas_src>
import functools

import jax
import jax.numpy as jnp
from jax.experimental import pallas as pl
from jax.experimental.pallas import tpu as pltpu


def _prenorm_attn_kernel(x_ref, g_ref, b_ref, w_ref, out_ref, attn_ref, *,
                         heads, dim_head, scale, eps):
    # x_ref:    (1, N, DIM)          -- tokens for batch b
    # g_ref:    (1, DIM)             -- LayerNorm weight (gamma)
    # b_ref:    (1, DIM)             -- LayerNorm bias   (beta)
    # w_ref:    (DIM, 3*inner)       -- [Wq.T | Wk.T | Wv.T], all heads fused
    # out_ref:  (1, N, inner)        -- context, lane-dense (h d) last dim
    # attn_ref: (1, heads, N, N)     -- attention probabilities
    x = x_ref[0].astype(jnp.float32)              # (N, DIM)
    gamma = g_ref[...].astype(jnp.float32)        # (1, DIM)
    beta = b_ref[...].astype(jnp.float32)         # (1, DIM)

    # ---- LayerNorm over the feature dim (population variance, eps inside sqrt)
    mean = jnp.mean(x, axis=-1, keepdims=True)
    xc = x - mean
    var = jnp.mean(xc * xc, axis=-1, keepdims=True)
    xn = xc * jax.lax.rsqrt(var + eps) * gamma + beta   # (N, DIM)

    # ---- Fused QKV projection: one MXU matmul for all heads and q/k/v.
    qkv = jnp.dot(xn, w_ref[...], preferred_element_type=jnp.float32)  # (N, 3*inner)

    inner = heads * dim_head
    ctx_parts = []
    attn_parts = []
    for h in range(heads):                         # static unrolled loop
        lo = h * dim_head
        q = qkv[:, lo:lo + dim_head] * scale       # scale folded into q
        k = qkv[:, inner + lo: inner + lo + dim_head]
        v = qkv[:, 2 * inner + lo: 2 * inner + lo + dim_head]

        dots = jnp.dot(q, k.T, preferred_element_type=jnp.float32)    # (N, N)

        # numerically stable softmax; divide via approx reciprocal (EUP slot)
        m = jnp.max(dots, axis=-1, keepdims=True)
        p = jnp.exp(dots - m)
        denom = jnp.sum(p, axis=-1, keepdims=True)
        attn = p * pl.reciprocal(denom, approx=True)                   # (N, N)

        ctx_parts.append(jnp.dot(attn, v, preferred_element_type=jnp.float32))
        attn_parts.append(attn)

    # single lane-dense stores per batch element
    out_ref[0] = jnp.concatenate(ctx_parts, axis=-1).astype(out_ref.dtype)   # (N, inner)
    attn_ref[0] = jnp.stack(attn_parts, axis=0).astype(attn_ref.dtype)       # (heads, N, N)


def prenorm_self_attention(x, gamma, beta, wq, wk, wv, heads, dim_head, eps=1e-5):
    """PreNorm(LayerNorm(dim), SelfAttention(heads, dim_head)) forward.

    x: (B, N, DIM); gamma/beta: (DIM,); wq/wk/wv: (inner_dim, DIM) PyTorch
    Linear layout (bias=False).  Returns (out (B,N,inner), attn (B,heads,N,N)).
    """
    B, N, DIM = x.shape
    inner = heads * dim_head
    assert wq.shape == (inner, DIM) and wk.shape == (inner, DIM) and wv.shape == (inner, DIM)
    scale = dim_head ** (-0.5)

    # y = xn @ W.T ; fuse all three projections (and all heads) column-wise.
    w_qkv = jnp.concatenate([wq.T, wk.T, wv.T], axis=1)   # (DIM, 3*inner)
    g2 = gamma.reshape(1, DIM)
    b2 = beta.reshape(1, DIM)

    kernel = functools.partial(
        _prenorm_attn_kernel, heads=heads, dim_head=dim_head, scale=scale, eps=eps)

    out, attn = pl.pallas_call(
        kernel,
        out_shape=(
            jax.ShapeDtypeStruct((B, N, inner), jnp.float32),
            jax.ShapeDtypeStruct((B, heads, N, N), jnp.float32),
        ),
        grid_spec=pltpu.PrefetchScalarGridSpec(
            num_scalar_prefetch=0,
            grid=(B,),
            in_specs=[
                pl.BlockSpec((1, N, DIM), lambda b: (b, 0, 0)),
                pl.BlockSpec((1, DIM), lambda b: (0, 0)),
                pl.BlockSpec((1, DIM), lambda b: (0, 0)),
                pl.BlockSpec((DIM, 3 * inner), lambda b: (0, 0)),
            ],
            out_specs=[
                pl.BlockSpec((1, N, inner), lambda b: (b, 0, 0)),
                pl.BlockSpec((1, heads, N, N), lambda b: (b, 0, 0, 0)),
            ],
        ),
        compiler_params=pltpu.CompilerParams(
            dimension_semantics=("parallel",),
        ),
    )(x, g2, b2, w_qkv)

    # to_out is nn.Identity() (project_out=False), so `out` is returned as-is.
    return out, attn


def _reference(x, gamma, beta, wq, wk, wv, heads, dim_head, eps=1e-5):
    B, N, DIM = x.shape
    scale = dim_head ** (-0.5)
    # LayerNorm
    mean = jnp.mean(x, axis=-1, keepdims=True)
    var = jnp.mean((x - mean) ** 2, axis=-1, keepdims=True)
    xn = (x - mean) / jnp.sqrt(var + eps) * gamma + beta
    # SelfAttention
    q = xn @ wq.T
    k = xn @ wk.T
    v = xn @ wv.T

    def split(t):
        return jnp.transpose(t.reshape(B, N, heads, dim_head), (0, 2, 1, 3))

    q, k, v = split(q), split(k), split(v)
    dots = jnp.einsum("bhid,bhjd->bhij", q, k) * scale
    attn = jax.nn.softmax(dots, axis=-1)
    out = jnp.einsum("bhij,bhjd->bhid", attn, v)
    out = jnp.transpose(out, (0, 2, 1, 3)).reshape(B, N, heads * dim_head)
    return out, attn


if __name__ == "__main__":
    # PreNorm(dim=32, SelfAttention(heads=2, dim_head=16)), x: (B=2, N=8, DIM=32)
    B, N, DIM = 2, 8, 32
    HEADS, DIM_HEAD = 2, 16
    INNER = HEADS * DIM_HEAD

    key = jax.random.PRNGKey(0)
    kx, kq, kk, kv, kg, kb = jax.random.split(key, 6)
    x = jax.random.normal(kx, (B, N, DIM), dtype=jnp.float32)

    # LayerNorm affine params (non-trivial to exercise the affine path).
    gamma = 1.0 + 0.1 * jax.random.normal(kg, (DIM,), dtype=jnp.float32)
    beta = 0.1 * jax.random.normal(kb, (DIM,), dtype=jnp.float32)

    # Bias-free Linear weights, PyTorch layout (out_features, in_features).
    std = (2.0 / (DIM + INNER)) ** 0.5
    wq = std * jax.random.normal(kq, (INNER, DIM), dtype=jnp.float32)
    wk = std * jax.random.normal(kk, (INNER, DIM), dtype=jnp.float32)
    wv = std * jax.random.normal(kv, (INNER, DIM), dtype=jnp.float32)

    out, attn = prenorm_self_attention(x, gamma, beta, wq, wk, wv, HEADS, DIM_HEAD)
    out = jax.block_until_ready(out)
    attn = jax.block_until_ready(attn)

    out_ref, attn_ref = _reference(x, gamma, beta, wq, wk, wv, HEADS, DIM_HEAD)
    assert out.shape == (B, N, INNER)
    assert attn.shape == (B, HEADS, N, N)
    # approx=True reciprocal in the softmax slightly loosens the tolerance.
    assert jnp.allclose(out, out_ref, atol=2e-3, rtol=2e-3)
    assert jnp.allclose(attn, attn_ref, atol=2e-3, rtol=2e-3)

    print("KERNEL_OK")
</pallas_src>

<mosaic_0001>
module attributes {stable_mosaic.version = 11 : i64} {
  func.func @_prenorm_attn_kernel(%arg0: i32, %arg1: memref<1x8x32xf32, #tpu.memory_space<vmem>>, %arg2: memref<1x32xf32, #tpu.memory_space<vmem>>, %arg3: memref<1x32xf32, #tpu.memory_space<vmem>>, %arg4: memref<32x96xf32, #tpu.memory_space<vmem>>, %arg5: memref<1x8x32xf32, #tpu.memory_space<vmem>>, %arg6: memref<1x2x8x8xf32, #tpu.memory_space<vmem>>) attributes {dimension_semantics = [#tpu.dimension_semantics<parallel>], iteration_bounds = array<i64: 2>, scalar_prefetch = 0 : i64, scratch_operands = 0 : i64, tpu.core_type = #tpu.core_type<tc>, window_params = [{transform_indices = @transform_0, window_bounds = array<i64: 1, 8, 32>}, {pipeline_mode = #tpu.pipeline_mode<synchronous>, transform_indices = @transform_1, window_bounds = array<i64: 1, 32>}, {pipeline_mode = #tpu.pipeline_mode<synchronous>, transform_indices = @transform_2, window_bounds = array<i64: 1, 32>}, {pipeline_mode = #tpu.pipeline_mode<synchronous>, transform_indices = @transform_3, window_bounds = array<i64: 32, 96>}, {transform_indices = @transform_4, window_bounds = array<i64: 1, 8, 32>}, {transform_indices = @transform_5, window_bounds = array<i64: 1, 2, 8, 8>}]} {
    %c0 = arith.constant 0 : index
    %c0_0 = arith.constant 0 : index
    %c0_1 = arith.constant 0 : index
    %0 = vector.load %arg1[%c0, %c0_0, %c0_1] : memref<1x8x32xf32, #tpu.memory_space<vmem>>, vector<1x8x32xf32>
    %1 = vector.shape_cast %0 : vector<1x8x32xf32> to vector<8x32xf32>
    %c0_2 = arith.constant 0 : index
    %c0_3 = arith.constant 0 : index
    %2 = vector.load %arg2[%c0_2, %c0_3] : memref<1x32xf32, #tpu.memory_space<vmem>>, vector<1x32xf32>
    %c0_4 = arith.constant 0 : index
    %c0_5 = arith.constant 0 : index
    %3 = vector.load %arg3[%c0_4, %c0_5] : memref<1x32xf32, #tpu.memory_space<vmem>>, vector<1x32xf32>
    %cst = arith.constant dense<0.000000e+00> : vector<8xf32>
    %4 = vector.multi_reduction <add>, %1, %cst [1] : vector<8x32xf32> to vector<8xf32>
    %5 = vector.shape_cast %4 : vector<8xf32> to vector<8x1xf32>
    %cst_6 = arith.constant 3.200000e+01 : f32
    %6 = vector.broadcast %cst_6 : f32 to vector<8x1xf32>
    %7 = arith.divf %5, %6 : vector<8x1xf32>
    %8 = vector.broadcast %7 : vector<8x1xf32> to vector<8x32xf32>
    %9 = arith.subf %1, %8 : vector<8x32xf32>
    %10 = arith.mulf %9, %9 : vector<8x32xf32>
    %cst_7 = arith.constant dense<0.000000e+00> : vector<8xf32>
    %11 = vector.multi_reduction <add>, %10, %cst_7 [1] : vector<8x32xf32> to vector<8xf32>
    %12 = vector.shape_cast %11 : vector<8xf32> to vector<8x1xf32>
    %cst_8 = arith.constant 3.200000e+01 : f32
    %13 = vector.broadcast %cst_8 : f32 to vector<8x1xf32>
    %14 = arith.divf %12, %13 : vector<8x1xf32>
    %cst_9 = arith.constant 9.99999974E-6 : f32
    %15 = vector.broadcast %cst_9 : f32 to vector<8x1xf32>
    %16 = arith.addf %14, %15 : vector<8x1xf32>
    %17 = math.rsqrt %16 : vector<8x1xf32>
    %18 = vector.broadcast %17 : vector<8x1xf32> to vector<8x32xf32>
    %19 = arith.mulf %9, %18 : vector<8x32xf32>
    %20 = vector.broadcast %2 : vector<1x32xf32> to vector<8x32xf32>
    %21 = arith.mulf %19, %20 : vector<8x32xf32>
    %22 = vector.broadcast %3 : vector<1x32xf32> to vector<8x32xf32>
    %23 = arith.addf %21, %22 : vector<8x32xf32>
    %c0_10 = arith.constant 0 : index
    %c0_11 = arith.constant 0 : index
    %24 = vector.load %arg4[%c0_10, %c0_11] : memref<32x96xf32, #tpu.memory_space<vmem>>, vector<32x96xf32>
    %cst_12 = arith.constant dense<0.000000e+00> : vector<8x96xf32>
    %25 = tpu.matmul %23, %24, %cst_12 {dimension_numbers = #tpu.dot_dimension_numbers<[1], [0], [0], [1], [0, 0, 1, 1], [], []>} : vector<8x32xf32>, vector<32x96xf32>, vector<8x96xf32> -> vector<8x96xf32>
    %26 = vector.extract_strided_slice %25 {offsets = [0, 0], sizes = [8, 16], strides = [1, 1]} : vector<8x96xf32> to vector<8x16xf32>
    %cst_13 = arith.constant 2.500000e-01 : f32
    %27 = vector.broadcast %cst_13 : f32 to vector<8x16xf32>
    %28 = arith.mulf %26, %27 : vector<8x16xf32>
    %29 = vector.extract_strided_slice %25 {offsets = [0, 32], sizes = [8, 16], strides = [1, 1]} : vector<8x96xf32> to vector<8x16xf32>
    %30 = vector.extract_strided_slice %25 {offsets = [0, 64], sizes = [8, 16], strides = [1, 1]} : vector<8x96xf32> to vector<8x16xf32>
    %31 = tpu.transpose %29, [1, 0] : vector<8x16xf32> -> vector<16x8xf32>
    %cst_14 = arith.constant dense<0.000000e+00> : vector<8x8xf32>
    %32 = tpu.matmul %28, %31, %cst_14 {dimension_numbers = #tpu.dot_dimension_numbers<[1], [0], [0], [1], [0, 0, 1, 1], [], []>} : vector<8x16xf32>, vector<16x8xf32>, vector<8x8xf32> -> vector<8x8xf32>
    %cst_15 = arith.constant dense<0xFF800000> : vector<8xf32>
    %33 = vector.multi_reduction <maximumf>, %32, %cst_15 [1] : vector<8x8xf32> to vector<8xf32>
    %34 = vector.shape_cast %33 : vector<8xf32> to vector<8x1xf32>
    %35 = vector.broadcast %34 : vector<8x1xf32> to vector<8x8xf32>
    %36 = arith.subf %32, %35 : vector<8x8xf32>
    %37 = math.exp %36 : vector<8x8xf32>
    %cst_16 = arith.constant dense<0.000000e+00> : vector<8xf32>
    %38 = vector.multi_reduction <add>, %37, %cst_16 [1] : vector<8x8xf32> to vector<8xf32>
    %39 = vector.shape_cast %38 : vector<8xf32> to vector<8x1xf32>
    %40 = tpu.reciprocal %39 {approx = true} : vector<8x1xf32> -> vector<8x1xf32>
    %41 = vector.broadcast %40 : vector<8x1xf32> to vector<8x8xf32>
    %42 = arith.mulf %37, %41 : vector<8x8xf32>
    %cst_17 = arith.constant dense<0.000000e+00> : vector<8x16xf32>
    %43 = tpu.matmul %42, %30, %cst_17 {dimension_numbers = #tpu.dot_dimension_numbers<[1], [0], [0], [1], [0, 0, 1, 1], [], []>} : vector<8x8xf32>, vector<8x16xf32>, vector<8x16xf32> -> vector<8x16xf32>
    %44 = vector.extract_strided_slice %25 {offsets = [0, 16], sizes = [8, 16], strides = [1, 1]} : vector<8x96xf32> to vector<8x16xf32>
    %cst_18 = arith.constant 2.500000e-01 : f32
    %45 = vector.broadcast %cst_18 : f32 to vector<8x16xf32>
    %46 = arith.mulf %44, %45 : vector<8x16xf32>
    %47 = vector.extract_strided_slice %25 {offsets = [0, 48], sizes = [8, 16], strides = [1, 1]} : vector<8x96xf32> to vector<8x16xf32>
    %48 = vector.extract_strided_slice %25 {offsets = [0, 80], sizes = [8, 16], strides = [1, 1]} : vector<8x96xf32> to vector<8x16xf32>
    %49 = tpu.transpose %47, [1, 0] : vector<8x16xf32> -> vector<16x8xf32>
    %cst_19 = arith.constant dense<0.000000e+00> : vector<8x8xf32>
    %50 = tpu.matmul %46, %49, %cst_19 {dimension_numbers = #tpu.dot_dimension_numbers<[1], [0], [0], [1], [0, 0, 1, 1], [], []>} : vector<8x16xf32>, vector<16x8xf32>, vector<8x8xf32> -> vector<8x8xf32>
    %cst_20 = arith.constant dense<0xFF800000> : vector<8xf32>
    %51 = vector.multi_reduction <maximumf>, %50, %cst_20 [1] : vector<8x8xf32> to vector<8xf32>
    %52 = vector.shape_cast %51 : vector<8xf32> to vector<8x1xf32>
    %53 = vector.broadcast %52 : vector<8x1xf32> to vector<8x8xf32>
    %54 = arith.subf %50, %53 : vector<8x8xf32>
    %55 = math.exp %54 : vector<8x8xf32>
    %cst_21 = arith.constant dense<0.000000e+00> : vector<8xf32>
    %56 = vector.multi_reduction <add>, %55, %cst_21 [1] : vector<8x8xf32> to vector<8xf32>
    %57 = vector.shape_cast %56 : vector<8xf32> to vector<8x1xf32>
    %58 = tpu.reciprocal %57 {approx = true} : vector<8x1xf32> -> vector<8x1xf32>
    %59 = vector.broadcast %58 : vector<8x1xf32> to vector<8x8xf32>
    %60 = arith.mulf %55, %59 : vector<8x8xf32>
    %cst_22 = arith.constant dense<0.000000e+00> : vector<8x16xf32>
    %61 = tpu.matmul %60, %48, %cst_22 {dimension_numbers = #tpu.dot_dimension_numbers<[1], [0], [0], [1], [0, 0, 1, 1], [], []>} : vector<8x8xf32>, vector<8x16xf32>, vector<8x16xf32> -> vector<8x16xf32>
    %62 = tpu.concatenate %43, %61 in 1 : vector<8x16xf32>, vector<8x16xf32> -> vector<8x32xf32>
    %c0_23 = arith.constant 0 : index
    %c0_24 = arith.constant 0 : index
    %c0_25 = arith.constant 0 : index
    %63 = vector.load %arg5[%c0_23, %c0_24, %c0_25] : memref<1x8x32xf32, #tpu.memory_space<vmem>>, vector<1x8x32xf32>
    %64 = vector.shape_cast %63 : vector<1x8x32xf32> to vector<8x32xf32>
    %65 = vector.shape_cast %62 : vector<8x32xf32> to vector<1x8x32xf32>
    tpu.vector_store %arg5[%c0_23, %c0_24, %c0_25], %65 {strides = array<i32>} : memref<1x8x32xf32, #tpu.memory_space<vmem>>, vector<1x8x32xf32>,
    %66 = vector.shape_cast %42 : vector<8x8xf32> to vector<1x8x8xf32>
    %67 = vector.shape_cast %60 : vector<8x8xf32> to vector<1x8x8xf32>
    %68 = tpu.concatenate %66, %67 in 0 : vector<1x8x8xf32>, vector<1x8x8xf32> -> vector<2x8x8xf32>
    %c0_26 = arith.constant 0 : index
    %c0_27 = arith.constant 0 : index
    %c0_28 = arith.constant 0 : index
    %c0_29 = arith.constant 0 : index
    %69 = vector.load %arg6[%c0_26, %c0_27, %c0_28, %c0_29] : memref<1x2x8x8xf32, #tpu.memory_space<vmem>>, vector<1x2x8x8xf32>
    %70 = vector.shape_cast %69 : vector<1x2x8x8xf32> to vector<2x8x8xf32>
    %71 = vector.shape_cast %68 : vector<2x8x8xf32> to vector<1x2x8x8xf32>
    tpu.vector_store %arg6[%c0_26, %c0_27, %c0_28, %c0_29], %71 {strides = array<i32>} : memref<1x2x8x8xf32, #tpu.memory_space<vmem>>, vector<1x2x8x8xf32>,
    return
  }
  func.func @transform_0(%arg0: i32) -> (i32, i32, i32) {
    %c0_i32 = arith.constant 0 : i32
    %c0_i32_0 = arith.constant 0 : i32
    %c0_i32_1 = arith.constant 0 : i32
    return %arg0, %c0_i32, %c0_i32_0 : i32, i32, i32
  }
  func.func @transform_1(%arg0: i32) -> (i32, i32) {
    %c0_i32 = arith.constant 0 : i32
    %c0_i32_0 = arith.constant 0 : i32
    %c0_i32_1 = arith.constant 0 : i32
    return %c0_i32, %c0_i32_0 : i32, i32
  }
  func.func @transform_2(%arg0: i32) -> (i32, i32) {
    %c0_i32 = arith.constant 0 : i32
    %c0_i32_0 = arith.constant 0 : i32
    %c0_i32_1 = arith.constant 0 : i32
    return %c0_i32, %c0_i32_0 : i32, i32
  }
  func.func @transform_3(%arg0: i32) -> (i32, i32) {
    %c0_i32 = arith.constant 0 : i32
    %c0_i32_0 = arith.constant 0 : i32
    %c0_i32_1 = arith.constant 0 : i32
    return %c0_i32, %c0_i32_0 : i32, i32
  }
  func.func @transform_4(%arg0: i32) -> (i32, i32, i32) {
    %c0_i32 = arith.constant 0 : i32
    %c0_i32_0 = arith.constant 0 : i32
    %c0_i32_1 = arith.constant 0 : i32
    return %arg0, %c0_i32, %c0_i32_0 : i32, i32, i32
  }
  func.func @transform_5(%arg0: i32) -> (i32, i32, i32, i32) {
    %c0_i32 = arith.constant 0 : i32
    %c0_i32_0 = arith.constant 0 : i32
    %c0_i32_1 = arith.constant 0 : i32
    %c0_i32_2 = arith.constant 0 : i32
    return %arg0, %c0_i32, %c0_i32_0, %c0_i32_1 : i32, i32, i32, i32
  }
}

</mosaic_0001>

<llo_original>
// kernel: tpu_custom_call.1
$region0: #{tpu_custom_call.1}
  #allocation0 [shape = 'u32[]', space=smem, size = 0x4, offset = 0x4, fixed_abs, tag = 'smem constant byte address 0x4 - core index']
  #allocation1 [shape = 'u32[144,128]{1,0:T(1,128)}', space=vmem, size = 0x12000, scoped, tag = 'internal scratch']
  %s0 = inlined_call_operand.hbm [shape: f32[2,8,32], index: 0, kind: input, shape index: {}]
  %s1 = inlined_call_operand.vmem [shape: f32[1,32], index: 1, kind: input, shape index: {}]
  %s2 = inlined_call_operand.vmem [shape: f32[1,32], index: 2, kind: input, shape index: {}]
  %s3 = inlined_call_operand.hbm [shape: f32[32,96], index: 3, kind: input, shape index: {}]
  %s4 = inlined_call_operand.hbm [shape: f32[2,8,32], index: 4, kind: output, shape index: {0}]
  %s5 = inlined_call_operand.hbm [shape: f32[2,2,8,8], index: 5, kind: output, shape index: {1}]
  %6 = xla_tuple %s4, %s5
  %s7 = sld [smem:[#allocation0]]
  $region65: #{tpu_custom_call.1} parent=0
    _
  %s9 = ssub.s32 1, %s7
  %s10 = scalar_select 0, %s9, %s7
  $region1: #{tpu_custom_call.1} parent=0
    #allocation2 [shape = 'u8[8192]{0}', space=vmem, size = 0x2000, scoped, tag = 'input window, operand 0']
    #allocation3 [shape = 's32[2]{0}', space=sflag, size = 0x8, scoped, tag = 'scoped memory for tpu_custom_call.1']
    #allocation4 [shape = 's32[2]{0}', space=sflag, size = 0x8, scoped, tag = 'scoped memory for tpu_custom_call.1']
    #allocation5 [shape = 'u8[16384]{0}', space=vmem, size = 0x4000, scoped, tag = 'input window, operand 3, single buffered']
    #allocation6 [shape = 's32[1]{0}', space=sflag, size = 0x4, scoped, tag = 'scoped memory for tpu_custom_call.1']
    #allocation7 [shape = 'u8[8192]{0}', space=vmem, size = 0x2000, scoped, tag = 'output window, operand 0']
    #allocation8 [shape = 'u8[16384]{0}', space=vmem, size = 0x4000, scoped, tag = 'output window, operand 1']
    #allocation9 [shape = 's32[2]{0}', space=sflag, size = 0x8, scoped, tag = 'scoped memory for tpu_custom_call.1']
    %11 = vsyncpa [#allocation3], 0
    %s12 = scalar_lea.sflag [#allocation3], 1
    %13 = vsyncpa %s12, 0
    %14 = vsyncpa [#allocation6], 0
    %15 = vsyncpa [#allocation4], 0
    %s16 = scalar_lea.sflag [#allocation4], 1
    %17 = vsyncpa %s16, 0
    %18 = vsyncpa [#allocation9], 0
    %s19 = scalar_lea.sflag [#allocation9], 1
    %20 = vsyncpa %s19, 0
    loop: start=0, step=1, limit=4
    $region2: #{tpu_custom_call.1} parent=1 // loop_pre_header
      _
    $region3: #{tpu_custom_call.1} parent=1 // loop_header
      %s22 = sphi 0, %s26
      %p23 = scmp.ge.s32.totalorder %s22, 4
      %s32 = sphi 0, %s34
      %s35 = sphi 0, %s32
      %s36 = sphi 0, %s35
      %s52 = sphi 0, %s36
      %s56 = sphi 0, %s56
      %s58 = sphi 0, %s56
      %s59 = sphi 0, %s58
      %s73 = sphi 0, %s59
      %s77 = sphi 0, %s77
      %s79 = sphi 0, %s77
      %s80 = sphi 0, %s79
      %s94 = sphi 0, %s80
      %s98 = sphi 0, %s98
      %s100 = sphi 0, %s98
      %s101 = sphi 0, %s100
      %s115 = sphi 0, %s101
      %s121 = sphi 0, %s123
      %s124 = sphi 0, %s121
      %s125 = sphi 0, %s124
      %s141 = sphi 0, %s125
      %s147 = sphi 0, %s149
      %s150 = sphi 0, %s147
      %s151 = sphi 0, %s150
      %s167 = sphi 0, %s151
    $region4: #{tpu_custom_call.1} parent=1 // loop_header_branch
      %25 = sbr.rel (%p23) target = $region8
    $region5: #{tpu_custom_call.1} parent=1 // loop_body
      %s27 = ssub.s32 %s22, 1
      %s28 = ssub.s32 %s22, 2
      %s29 = sadd.s32 %s22, 1
      %s30 = ssub.s32 %s22, %s29
      %p31 = scmp.eq.s32.totalorder %s30, 0
      %s33 = sadd.s32 %s32, 1
      %s34 = scalar_select %p31, %s32, %s33
      %p37 = pneg %p31
      %p38 = scmp.eq.s32.totalorder %s22, 1
      %p39 = por %p37, %p38
      %p40 = scmp.ne.s32.totalorder %s32, %s35
      %p41 = scmp.eq.s32.totalorder %s22, 0
      %p42 = por %p40, %p41
      %p43 = scmp.ne.s32.totalorder %s32, %s35
      %p44 = scmp.eq.s32.totalorder %s27, 1
      %p45 = por %p43, %p44
      %p46 = scmp.ne.s32.totalorder %s35, %s36
      %p47 = scmp.eq.s32.totalorder %s27, 0
      %p48 = por %p46, %p47
      %p49 = scmp.ne.s32.totalorder %s35, %s36
      %p50 = scmp.eq.s32.totalorder %s28, 1
      %p51 = por %p49, %p50
      %p53 = scmp.ne.s32.totalorder %s36, %s52
      %p54 = scmp.eq.s32.totalorder %s28, 0
      %p55 = por %p53, %p54
      %s57 = sadd.s32 %s56, 1
      %p60 = scmp.eq.s32.totalorder %s22, 1
      %p61 = scmp.ne.s32.totalorder %s56, %s58
      %p62 = scmp.eq.s32.totalorder %s22, 0
      %p63 = por %p61, %p62
      %p64 = scmp.ne.s32.totalorder %s56, %s58
      %p65 = scmp.eq.s32.totalorder %s27, 1
      %p66 = por %p64, %p65
      %p67 = scmp.ne.s32.totalorder %s58, %s59
      %p68 = scmp.eq.s32.totalorder %s27, 0
      %p69 = por %p67, %p68
      %p70 = scmp.ne.s32.totalorder %s58, %s59
      %p71 = scmp.eq.s32.totalorder %s28, 1
      %p72 = por %p70, %p71
      %p74 = scmp.ne.s32.totalorder %s59, %s73
      %p75 = scmp.eq.s32.totalorder %s28, 0
      %p76 = por %p74, %p75
      %s78 = sadd.s32 %s77, 1
      %p81 = scmp.eq.s32.totalorder %s22, 1
      %p82 = scmp.ne.s32.totalorder %s77, %s79
      %p83 = scmp.eq.s32.totalorder %s22, 0
      %p84 = por %p82, %p83
      %p85 = scmp.ne.s32.totalorder %s77, %s79
      %p86 = scmp.eq.s32.totalorder %s27, 1
      %p87 = por %p85, %p86
      %p88 = scmp.ne.s32.totalorder %s79, %s80
      %p89 = scmp.eq.s32.totalorder %s27, 0
      %p90 = por %p88, %p89
      %p91 = scmp.ne.s32.totalorder %s79, %s80
      %p92 = scmp.eq.s32.totalorder %s28, 1
      %p93 = por %p91, %p92
      %p95 = scmp.ne.s32.totalorder %s80, %s94
      %p96 = scmp.eq.s32.totalorder %s28, 0
      %p97 = por %p95, %p96
      %s99 = sadd.s32 %s98, 1
      %p102 = scmp.eq.s32.totalorder %s22, 1
      %p103 = scmp.ne.s32.totalorder %s98, %s100
      %p104 = scmp.eq.s32.totalorder %s22, 0
      %p105 = por %p103, %p104
      %p106 = scmp.ne.s32.totalorder %s98, %s100
      %p107 = scmp.eq.s32.totalorder %s27, 1
      %p108 = por %p106, %p107
      %p109 = scmp.ne.s32.totalorder %s100, %s101
      %p110 = scmp.eq.s32.totalorder %s27, 0
      %p111 = por %p109, %p110
      %p112 = scmp.ne.s32.totalorder %s100, %s101
      %p113 = scmp.eq.s32.totalorder %s28, 1
      %p114 = por %p112, %p113
      %p116 = scmp.ne.s32.totalorder %s101, %s115
      %p117 = scmp.eq.s32.totalorder %s28, 0
      %p118 = por %p116, %p117
      %s119 = ssub.s32 %s22, %s29
      %p120 = scmp.eq.s32.totalorder %s119, 0
      %s122 = sadd.s32 %s121, 1
      %s123 = scalar_select %p120, %s121, %s122
      %p126 = pneg %p120
      %p127 = scmp.eq.s32.totalorder %s22, 1
      %p128 = por %p126, %p127
      %p129 = scmp.ne.s32.totalorder %s121, %s124
      %p130 = scmp.eq.s32.totalorder %s22, 0
      %p131 = por %p129, %p130
      %p132 = scmp.ne.s32.totalorder %s121, %s124
      %p133 = scmp.eq.s32.totalorder %s27, 1
      %p134 = por %p132, %p133
      %p135 = scmp.ne.s32.totalorder %s124, %s125
      %p136 = scmp.eq.s32.totalorder %s27, 0
      %p137 = por %p135, %p136
      %p138 = scmp.ne.s32.totalorder %s124, %s125
      %p139 = scmp.eq.s32.totalorder %s28, 1
      %p140 = por %p138, %p139
      %p142 = scmp.ne.s32.totalorder %s125, %s141
      %p143 = scmp.eq.s32.totalorder %s28, 0
      %p144 = por %p142, %p143
      %s145 = ssub.s32 %s22, %s29
      %p146 = scmp.eq.s32.totalorder %s145, 0
      %s148 = sadd.s32 %s147, 1
      %s149 = scalar_select %p146, %s147, %s148
      %p152 = pneg %p146
      %p153 = scmp.eq.s32.totalorder %s22, 1
      %p154 = por %p152, %p153
      %p155 = scmp.ne.s32.totalorder %s147, %s150
      %p156 = scmp.eq.s32.totalorder %s22, 0
      %p157 = por %p155, %p156
      %p158 = scmp.ne.s32.totalorder %s147, %s150
      %p159 = scmp.eq.s32.totalorder %s27, 1
      %p160 = por %p158, %p159
      %p161 = scmp.ne.s32.totalorder %s150, %s151
      %p162 = scmp.eq.s32.totalorder %s27, 0
      %p163 = por %p161, %p162
      %p164 = scmp.ne.s32.totalorder %s150, %s151
      %p165 = scmp.eq.s32.totalorder %s28, 1
      %p166 = por %p164, %p165
      %p168 = scmp.ne.s32.totalorder %s151, %s167
      %p169 = scmp.eq.s32.totalorder %s28, 0
      %p170 = por %p168, %p169
      %p171 = scmp.le.s32.totalorder 1, %s22
      %p172 = scmp.lt.s32.totalorder %s22, 3
      %p173 = pnand %p171, %p172
      %p174 = pneg %p173
      // Predicated region
      $region9: #{tpu_custom_call.1} parent=5 // pred_check
        _
      $region10: #{tpu_custom_call.1} parent=5 // pred_check_branch
        %176 = sbr.rel (%p173) target = $region12
      $region11: #{tpu_custom_call.1} parent=5 // pred_region
        %s177 = ssub.s32 %s22, 1
        // Predicated region
        $region13: #{tpu_custom_call.1} parent=11 // pred_check
          %p178 = pneg %p69
        $region14: #{tpu_custom_call.1} parent=11 // pred_check_branch
          %180 = sbr.rel (%p178) target = $region16
        $region15: #{tpu_custom_call.1} parent=11 // pred_region
          _
        $region16: #{tpu_custom_call.1} parent=11 // pred_fallthru
          _
        // Predicated region
        $region17: #{tpu_custom_call.1} parent=11 // pred_check
          %p181 = pneg %p90
        $region18: #{tpu_custom_call.1} parent=11 // pred_check_branch
          %183 = sbr.rel (%p181) target = $region20
        $region19: #{tpu_custom_call.1} parent=11 // pred_region
          _
        $region20: #{tpu_custom_call.1} parent=11 // pred_fallthru
          _
        // Predicated region
        $region21: #{tpu_custom_call.1} parent=11 // pred_check
          %p184 = pneg %p111
        $region22: #{tpu_custom_call.1} parent=11 // pred_check_branch
          %186 = sbr.rel (%p184) target = $region24
        $region23: #{tpu_custom_call.1} parent=11 // pred_region
          %s188 = ssub.s32 512, 512
          %189 = vsyncadd [#allocation6], %s188
          %s190 = sshll.u32 [#allocation5], 4
          %s191 = int_to_ptr.vmem [resolvable:$true] %s190
          %196 = dma.hbm_to_vmem [thread:$0]  %s3, 512, %s191, [#allocation6], 128, 128, 8
        $region24: #{tpu_custom_call.1} parent=11 // pred_fallthru
          _
      $region12: #{tpu_custom_call.1} parent=5 // pred_fallthru
        _
      %p197 = scmp.lt.s32.totalorder %s22, 2
      // Predicated region
      $region25: #{tpu_custom_call.1} parent=5 // pred_check
        %p198 = pneg %p197
      $region26: #{tpu_custom_call.1} parent=5 // pred_check_branch
        %200 = sbr.rel (%p198) target = $region28
      $region27: #{tpu_custom_call.1} parent=5 // pred_region
        // Predicated region
        $region29: #{tpu_custom_call.1} parent=27 // pred_check
          %p201 = pneg %p42
        $region30: #{tpu_custom_call.1} parent=27 // pred_check_branch
          %203 = sbr.rel (%p201) target = $region32
        $region31: #{tpu_custom_call.1} parent=27 // pred_region
          %s204 = sand.u32 %s32, 1
          %s205 = scalar_lea.sflag [#allocation3], %s204
          %s206 = sand.u32 %s32, 1
          %s207 = smul.addr %s206, 8
          %s208 = scalar_lea.vmem [#allocation2], %s207
          %s210 = ssub.s32 128, 128
          %211 = vsyncadd %s205, %s210
          %s212 = smul.addr %s22, 128
          %s213 = scalar_lea.hbm %s0, %s212
          %s215 = sshll.u32 %s208, 4
          %s216 = int_to_ptr.vmem [resolvable:$true] %s215
          %218 = dma.hbm_to_vmem [thread:$0]  %s213, 128, %s216, %s205
        $region32: #{tpu_custom_call.1} parent=27 // pred_fallthru
          _
      $region28: #{tpu_custom_call.1} parent=5 // pred_fallthru
        _
      %p219 = scmp.le.s32.totalorder 1, %s22
      %p220 = scmp.lt.s32.totalorder %s22, 3
      %p221 = pnand %p219, %p220
      %p222 = pneg %p221
      // Predicated region
      $region33: #{tpu_custom_call.1} parent=5 // pred_check
        _
      $region34: #{tpu_custom_call.1} parent=5 // pred_check_branch
        %224 = sbr.rel (%p221) target = $region36
      $region35: #{tpu_custom_call.1} parent=5 // pred_region
        %s225 = ssub.s32 %s22, 1
        %s226 = sand.u32 %s35, 1
        %s227 = scalar_lea.sflag [#allocation3], %s226
        %s228 = sand.u32 %s35, 1
        %s229 = smul.addr %s228, 8
        %s230 = scalar_lea.vmem [#allocation2], %s229
        // Predicated region
        $region37: #{tpu_custom_call.1} parent=35 // pred_check
          %p231 = pneg %p48
        $region38: #{tpu_custom_call.1} parent=35 // pred_check_branch
          %233 = sbr.rel (%p231) target = $region40
        $region39: #{tpu_custom_call.1} parent=35 // pred_region
          %234 = dma.done %s227, 128
        $region40: #{tpu_custom_call.1} parent=35 // pred_fallthru
          _
        // Predicated region
        $region41: #{tpu_custom_call.1} parent=35 // pred_check
          %p235 = pneg %p111
        $region42: #{tpu_custom_call.1} parent=35 // pred_check_branch
          %237 = sbr.rel (%p235) target = $region44
        $region43: #{tpu_custom_call.1} parent=35 // pred_region
          %238 = dma.done [#allocation6], 512
        $region44: #{tpu_custom_call.1} parent=35 // pred_fallthru
          _
        %s239 = sand.u32 %s35, 1
        %s240 = scalar_lea.sflag [#allocation3], %s239
        %s241 = sand.u32 %s35, 1
        %s242 = smul.addr %s241, 8
        %s243 = scalar_lea.vmem [#allocation2], %s242
        %p244 = pneg %p48
        %p245 = pneg %p45
        %p246 = pneg %p69
        %p247 = pneg %p66
        %p248 = pneg %p90
        %p249 = pneg %p87
        %p250 = pneg %p111
        %p251 = pneg %p108
        %p252 = pneg %p137
        %p253 = pneg %p134
        %s254 = sand.u32 %s124, 1
        %s255 = scalar_lea.sflag [#allocation4], %s254
        %s256 = sand.u32 %s124, 1
        %s257 = smul.addr %s256, 8
        %s258 = scalar_lea.vmem [#allocation7], %s257
        %p259 = pneg %p163
        %p260 = pneg %p160
        %s261 = sand.u32 %s150, 1
        %s262 = scalar_lea.sflag [#allocation9], %s261
        %s263 = sand.u32 %s150, 1
        %s264 = smul.addr %s263, 16
        %s265 = scalar_lea.vmem [#allocation8], %s264
        %v266 = vld [vmem:[%s230] sm:$0xff]
        %v267 = vld [vmem:[%s1] sm:$0x1]
        %v268 = vld [vmem:[%s2] sm:$0x1]
        %vm269 = vcmask 261120
        %v270 = vsel %vm269, %v266, 0.0
        %271 = vadd.xlane.f32.xlu0 %v270
        %v272 = vpop.xlane.xlu0 %271
        %v273 = vrcp.pop 32.0
        %v274 = vmul.f32 %v272, %v273
        %v275 = vsub.f32 %v266, %v274
        %v276 = vmul.f32 %v275, %v275
        %v277 = vsel %vm269, %v276, 0.0
        %278 = vadd.xlane.f32.xlu0 %v277
        %v279 = vpop.xlane.xlu0 %278
        %v280 = vmul.f32 %v279, %v273
        %v281 = vadd.f32 %v280, 1e-05
        %v282 = vrsqrt.pop %v281
        %v283 = vmul.f32 %v275, %v282
        %v285 = vlaneseq
        %v286 = vshrl.u32 %v285, 7
        %v287 = vsub.s32 0, %v286
        %v288 = vrot.slane %v267, %v287
        %v290 = vmul.f32 %v283, %v288
        %v292 = vlaneseq
        %v293 = vshrl.u32 %v292, 7
        %v294 = vsub.s32 0, %v293
        %v295 = vrot.slane %v268, %v294
        %v297 = vadd.f32 %v290, %v295
        %v298 = vld [vmem:[#allocation5] sm:$0xff]
        %v299 = vld [vmem:[#allocation5 + $0x8] sm:$0xff]
        %v300 = vld [vmem:[#allocation5 + $0x10] sm:$0xff]
        %v301 = vld [vmem:[#allocation5 + $0x18] sm:$0xff]
        %v303 = vsel %vm269, %v297, 0
        %305 = vmatprep.subr.mxu0 0.0
        %306 = vmatpush1.msra.mxu0 0.0
        %307 = vmatprep.subr.mxu0 0.0
        %308 = vmatpush1.msra.mxu0 0.0
        %309 = vmatprep.subr.mxu0 0.0
        %310 = vmatpush1.msra.mxu0 0.0
        %311 = vmatprep.subr.mxu0 0.0
        %312 = vmatpush1.msra.mxu0 0.0
        %313 = vmatprep.subr.mxu0 0.0
        %314 = vmatpush1.msra.mxu0 0.0
        %315 = vmatprep.subr.mxu0 0.0
        %316 = vmatpush1.msra.mxu0 0.0
        %317 = vmatprep.subr.mxu0 0.0
        %318 = vmatpush1.msra.mxu0 0.0
        %319 = vmatprep.subr.mxu0 0.0
        %320 = vmatpush1.msra.mxu0 0.0
        %321 = vmatprep.subr.mxu0 0.0
        %322 = vmatpush1.msra.mxu0 0.0
        %323 = vmatprep.subr.mxu0 0.0
        %324 = vmatpush1.msra.mxu0 0.0
        %325 = vmatprep.subr.mxu0 0.0
        %326 = vmatpush1.msra.mxu0 0.0
        %327 = vmatprep.subr.mxu0 0.0
        %328 = vmatpush1.msra.mxu0 0.0
        %329 = vmatprep.subr.mxu0 0.0
        %330 = vmatpush1.msra.mxu0 %v301
        %331 = vmatprep.subr.mxu0 0.0
        %332 = vmatpush1.msra.mxu0 %v300
        %333 = vmatprep.subr.mxu0 0.0
        %334 = vmatpush1.msra.mxu0 %v299
        %335 = vmatprep.subr.mxu0 0.0
        %336 = vmatpush1.msra.mxu0 %v298
        %337 = vmatprep.subr.mxu0 0.0
        %338 = vmatpush2.msra.mxu0 0.0
        %339 = vmatprep.subr.mxu0 0.0
        %340 = vmatpush2.msra.mxu0 0.0
        %341 = vmatprep.subr.mxu0 0.0
        %342 = vmatpush2.msra.mxu0 0.0
        %343 = vmatprep.subr.mxu0 0.0
        %344 = vmatpush2.msra.mxu0 0.0
        %345 = vmatprep.subr.mxu0 0.0
        %346 = vmatpush2.msra.mxu0 0.0
        %347 = vmatprep.subr.mxu0 0.0
        %348 = vmatpush2.msra.mxu0 0.0
        %349 = vmatprep.subr.mxu0 0.0
        %350 = vmatpush2.msra.mxu0 0.0
        %351 = vmatprep.subr.mxu0 0.0
        %352 = vmatpush2.msra.mxu0 0.0
        %353 = vmatprep.subr.mxu0 0.0
        %354 = vmatpush2.msra.mxu0 0.0
        %355 = vmatprep.subr.mxu0 0.0
        %356 = vmatpush2.msra.mxu0 0.0
        %357 = vmatprep.subr.mxu0 0.0
        %358 = vmatpush2.msra.mxu0 0.0
        %359 = vmatprep.subr.mxu0 0.0
        %360 = vmatpush2.msra.mxu0 0.0
        %361 = vmatprep.subr.mxu0 0.0
        %362 = vmatpush2.msra.mxu0 0.0
        %363 = vmatprep.subr.mxu0 0.0
        %364 = vmatpush2.msra.mxu0 0.0
        %365 = vmatprep.subr.mxu0 0.0
        %366 = vmatpush2.msra.mxu0 0.0
        %367 = vmatprep.subr.mxu0 0.0
        %368 = vmatpush2.msra.mxu0 0.0
        %369 = vmatprep.mubr.f32.mxu0 0.0
        %370 = vmatmul.mubr.f32.gmra.mxu0 %v303
        %v371 = vpop.f32.mrf.mxu0
        %v372 = vadd.f32 0.0, %v371
        %v373 = vpop.f32.mrf.mxu0
        %374 = vdwg.mxu0
        %v375 = vmul.f32 %v372, 0.25
        %377 = vrot.lane.b32.xlu0 %v372, 96
        %v378 = vpop.permute.xlu0 %377
        %vm379 = vcmask 130048
        %v381 = vsel %vm379, %v375, 0
        %v383 = vsel %vm379, %v378, 0
        %385 = vmatprep.subr.mxu0 0.0
        %386 = vmatpush1.xpose.msra.mxu0 0.0
        %387 = vmatprep.subr.mxu0 0.0
        %388 = vmatpush1.xpose.msra.mxu0 0.0
        %389 = vmatprep.subr.mxu0 0.0
        %390 = vmatpush1.xpose.msra.mxu0 0.0
        %391 = vmatprep.subr.mxu0 0.0
        %392 = vmatpush1.xpose.msra.mxu0 0.0
        %393 = vmatprep.subr.mxu0 0.0
        %394 = vmatpush1.xpose.msra.mxu0 0.0
        %395 = vmatprep.subr.mxu0 0.0
        %396 = vmatpush1.xpose.msra.mxu0 0.0
        %397 = vmatprep.subr.mxu0 0.0
        %398 = vmatpush1.xpose.msra.mxu0 0.0
        %399 = vmatprep.subr.mxu0 0.0
        %400 = vmatpush1.xpose.msra.mxu0 0.0
        %401 = vmatprep.subr.mxu0 0.0
        %402 = vmatpush1.xpose.msra.mxu0 0.0
        %403 = vmatprep.subr.mxu0 0.0
        %404 = vmatpush1.xpose.msra.mxu0 0.0
        %405 = vmatprep.subr.mxu0 0.0
        %406 = vmatpush1.xpose.msra.mxu0 0.0
        %407 = vmatprep.subr.mxu0 0.0
        %408 = vmatpush1.xpose.msra.mxu0 0.0
        %409 = vmatprep.subr.mxu0 0.0
        %410 = vmatpush1.xpose.msra.mxu0 0.0
        %411 = vmatprep.subr.mxu0 0.0
        %412 = vmatpush1.xpose.msra.mxu0 0.0
        %413 = vmatprep.subr.mxu0 0.0
        %414 = vmatpush1.xpose.msra.mxu0 0.0
        %415 = vmatprep.subr.mxu0 0.0
        %416 = vmatpush1.xpose.msra.mxu0 %v383
        %417 = vmatprep.subr.mxu0 0.0
        %418 = vmatpush2.xpose.msra.mxu0 0.0
        %419 = vmatprep.subr.mxu0 0.0
        %420 = vmatpush2.xpose.msra.mxu0 0.0
        %421 = vmatprep.subr.mxu0 0.0
        %422 = vmatpush2.xpose.msra.mxu0 0.0
        %423 = vmatprep.subr.mxu0 0.0
        %424 = vmatpush2.xpose.msra.mxu0 0.0
        %425 = vmatprep.subr.mxu0 0.0
        %426 = vmatpush2.xpose.msra.mxu0 0.0
        %427 = vmatprep.subr.mxu0 0.0
        %428 = vmatpush2.xpose.msra.mxu0 0.0
        %429 = vmatprep.subr.mxu0 0.0
        %430 = vmatpush2.xpose.msra.mxu0 0.0
        %431 = vmatprep.subr.mxu0 0.0
        %432 = vmatpush2.xpose.msra.mxu0 0.0
        %433 = vmatprep.subr.mxu0 0.0
        %434 = vmatpush2.xpose.msra.mxu0 0.0
        %435 = vmatprep.subr.mxu0 0.0
        %436 = vmatpush2.xpose.msra.mxu0 0.0
        %437 = vmatprep.subr.mxu0 0.0
        %438 = vmatpush2.xpose.msra.mxu0 0.0
        %439 = vmatprep.subr.mxu0 0.0
        %440 = vmatpush2.xpose.msra.mxu0 0.0
        %441 = vmatprep.subr.mxu0 0.0
        %442 = vmatpush2.xpose.msra.mxu0 0.0
        %443 = vmatprep.subr.mxu0 0.0
        %444 = vmatpush2.xpose.msra.mxu0 0.0
        %445 = vmatprep.subr.mxu0 0.0
        %446 = vmatpush2.xpose.msra.mxu0 0.0
        %447 = vmatprep.subr.mxu0 0.0
        %448 = vmatpush2.xpose.msra.mxu0 0.0
        %449 = vmatprep.mubr.f32.mxu0 0.0
        %450 = vmatmul.mubr.f32.gmra.mxu0 %v381
        %v451 = vpop.f32.mrf.mxu0
        %v452 = vadd.f32 0.0, %v451
        %v453 = vpop.f32.mrf.mxu0
        %454 = vdwg.mxu0
        %vm455 = vcmask 64512
        %v456 = vsel %vm455, %v452, -inf
        %457 = vmax.xlane.f32.xlu0 %v456
        %v458 = vpop.xlane.xlu0 %457
        %v459 = vsub.f32 %v452, %v458
        %v460 = vmul.f32 %v459, 1.442695
        %v461 = vpow.pop %v460
        %v462 = vsel %vm455, %v461, 0.0
        %463 = vadd.xlane.f32.xlu0 %v462
        %v464 = vpop.xlane.xlu0 %463
        %v465 = vrcp.pop %v464
        %v466 = vmul.f32 %v461, %v465
        %467 = vrot.lane.b32.xlu0 %v372, 64
        %v468 = vpop.permute.xlu0 %467
        %v471 = vsel %vm455, %v466, 0
        %473 = vmatprep.subr.mxu0 0.0
        %474 = vmatpush1.msra.mxu0 0.0
        %475 = vmatprep.subr.mxu0 0.0
        %476 = vmatpush1.msra.mxu0 0.0
        %477 = vmatprep.subr.mxu0 0.0
        %478 = vmatpush1.msra.mxu0 0.0
        %479 = vmatprep.subr.mxu0 0.0
        %480 = vmatpush1.msra.mxu0 0.0
        %481 = vmatprep.subr.mxu0 0.0
        %482 = vmatpush1.msra.mxu0 0.0
        %483 = vmatprep.subr.mxu0 0.0
        %484 = vmatpush1.msra.mxu0 0.0
        %485 = vmatprep.subr.mxu0 0.0
        %486 = vmatpush1.msra.mxu0 0.0
        %487 = vmatprep.subr.mxu0 0.0
        %488 = vmatpush1.msra.mxu0 0.0
        %489 = vmatprep.subr.mxu0 0.0
        %490 = vmatpush1.msra.mxu0 0.0
        %491 = vmatprep.subr.mxu0 0.0
        %492 = vmatpush1.msra.mxu0 0.0
        %493 = vmatprep.subr.mxu0 0.0
        %494 = vmatpush1.msra.mxu0 0.0
        %495 = vmatprep.subr.mxu0 0.0
        %496 = vmatpush1.msra.mxu0 0.0
        %497 = vmatprep.subr.mxu0 0.0
        %498 = vmatpush1.msra.mxu0 0.0
        %499 = vmatprep.subr.mxu0 0.0
        %500 = vmatpush1.msra.mxu0 0.0
        %501 = vmatprep.subr.mxu0 0.0
        %502 = vmatpush1.msra.mxu0 0.0
        %503 = vmatprep.subr.mxu0 0.0
        %504 = vmatpush1.msra.mxu0 %v468
        %505 = vmatprep.subr.mxu0 0.0
        %506 = vmatpush2.msra.mxu0 0.0
        %507 = vmatprep.subr.mxu0 0.0
        %508 = vmatpush2.msra.mxu0 0.0
        %509 = vmatprep.subr.mxu0 0.0
        %510 = vmatpush2.msra.mxu0 0.0
        %511 = vmatprep.subr.mxu0 0.0
        %512 = vmatpush2.msra.mxu0 0.0
        %513 = vmatprep.subr.mxu0 0.0
        %514 = vmatpush2.msra.mxu0 0.0
        %515 = vmatprep.subr.mxu0 0.0
        %516 = vmatpush2.msra.mxu0 0.0
        %517 = vmatprep.subr.mxu0 0.0
        %518 = vmatpush2.msra.mxu0 0.0
        %519 = vmatprep.subr.mxu0 0.0
        %520 = vmatpush2.msra.mxu0 0.0
        %521 = vmatprep.subr.mxu0 0.0
        %522 = vmatpush2.msra.mxu0 0.0
        %523 = vmatprep.subr.mxu0 0.0
        %524 = vmatpush2.msra.mxu0 0.0
        %525 = vmatprep.subr.mxu0 0.0
        %526 = vmatpush2.msra.mxu0 0.0
        %527 = vmatprep.subr.mxu0 0.0
        %528 = vmatpush2.msra.mxu0 0.0
        %529 = vmatprep.subr.mxu0 0.0
        %530 = vmatpush2.msra.mxu0 0.0
        %531 = vmatprep.subr.mxu0 0.0
        %532 = vmatpush2.msra.mxu0 0.0
        %533 = vmatprep.subr.mxu0 0.0
        %534 = vmatpush2.msra.mxu0 0.0
        %535 = vmatprep.subr.mxu0 0.0
        %536 = vmatpush2.msra.mxu0 0.0
        %537 = vmatprep.mubr.f32.mxu0 0.0
        %538 = vmatmul.mubr.f32.gmra.mxu0 %v471
        %v539 = vpop.f32.mrf.mxu0
        %v540 = vadd.f32 0.0, %v539
        %v541 = vpop.f32.mrf.mxu0
        %542 = vdwg.mxu0
        %543 = vrot.lane.b32.xlu0 %v375, 112
        %v544 = vpop.permute.xlu0 %543
        %545 = vrot.lane.b32.xlu0 %v372, 80
        %v546 = vpop.permute.xlu0 %545
        %v547 = vsel %vm379, %v544, 0
        %v549 = vsel %vm379, %v546, 0
        %551 = vmatprep.subr.mxu0 0.0
        %552 = vmatpush1.xpose.msra.mxu0 0.0
        %553 = vmatprep.subr.mxu0 0.0
        %554 = vmatpush1.xpose.msra.mxu0 0.0
        %555 = vmatprep.subr.mxu0 0.0
        %556 = vmatpush1.xpose.msra.mxu0 0.0
        %557 = vmatprep.subr.mxu0 0.0
        %558 = vmatpush1.xpose.msra.mxu0 0.0
        %559 = vmatprep.subr.mxu0 0.0
        %560 = vmatpush1.xpose.msra.mxu0 0.0
        %561 = vmatprep.subr.mxu0 0.0
        %562 = vmatpush1.xpose.msra.mxu0 0.0
        %563 = vmatprep.subr.mxu0 0.0
        %564 = vmatpush1.xpose.msra.mxu0 0.0
        %565 = vmatprep.subr.mxu0 0.0
        %566 = vmatpush1.xpose.msra.mxu0 0.0
        %567 = vmatprep.subr.mxu0 0.0
        %568 = vmatpush1.xpose.msra.mxu0 0.0
        %569 = vmatprep.subr.mxu0 0.0
        %570 = vmatpush1.xpose.msra.mxu0 0.0
        %571 = vmatprep.subr.mxu0 0.0
        %572 = vmatpush1.xpose.msra.mxu0 0.0
        %573 = vmatprep.subr.mxu0 0.0
        %574 = vmatpush1.xpose.msra.mxu0 0.0
        %575 = vmatprep.subr.mxu0 0.0
        %576 = vmatpush1.xpose.msra.mxu0 0.0
        %577 = vmatprep.subr.mxu0 0.0
        %578 = vmatpush1.xpose.msra.mxu0 0.0
        %579 = vmatprep.subr.mxu0 0.0
        %580 = vmatpush1.xpose.msra.mxu0 0.0
        %581 = vmatprep.subr.mxu0 0.0
        %582 = vmatpush1.xpose.msra.mxu0 %v549
        %583 = vmatprep.subr.mxu0 0.0
        %584 = vmatpush2.xpose.msra.mxu0 0.0
        %585 = vmatprep.subr.mxu0 0.0
        %586 = vmatpush2.xpose.msra.mxu0 0.0
        %587 = vmatprep.subr.mxu0 0.0
        %588 = vmatpush2.xpose.msra.mxu0 0.0
        %589 = vmatprep.subr.mxu0 0.0
        %590 = vmatpush2.xpose.msra.mxu0 0.0
        %591 = vmatprep.subr.mxu0 0.0
        %592 = vmatpush2.xpose.msra.mxu0 0.0
        %593 = vmatprep.subr.mxu0 0.0
        %594 = vmatpush2.xpose.msra.mxu0 0.0
        %595 = vmatprep.subr.mxu0 0.0
        %596 = vmatpush2.xpose.msra.mxu0 0.0
        %597 = vmatprep.subr.mxu0 0.0
        %598 = vmatpush2.xpose.msra.mxu0 0.0
        %599 = vmatprep.subr.mxu0 0.0
        %600 = vmatpush2.xpose.msra.mxu0 0.0
        %601 = vmatprep.subr.mxu0 0.0
        %602 = vmatpush2.xpose.msra.mxu0 0.0
        %603 = vmatprep.subr.mxu0 0.0
        %604 = vmatpush2.xpose.msra.mxu0 0.0
        %605 = vmatprep.subr.mxu0 0.0
        %606 = vmatpush2.xpose.msra.mxu0 0.0
        %607 = vmatprep.subr.mxu0 0.0
        %608 = vmatpush2.xpose.msra.mxu0 0.0
        %609 = vmatprep.subr.mxu0 0.0
        %610 = vmatpush2.xpose.msra.mxu0 0.0
        %611 = vmatprep.subr.mxu0 0.0
        %612 = vmatpush2.xpose.msra.mxu0 0.0
        %613 = vmatprep.subr.mxu0 0.0
        %614 = vmatpush2.xpose.msra.mxu0 0.0
        %615 = vmatprep.mubr.f32.mxu0 0.0
        %616 = vmatmul.mubr.f32.gmra.mxu0 %v547
        %v617 = vpop.f32.mrf.mxu0
        %v618 = vadd.f32 0.0, %v617
        %v619 = vpop.f32.mrf.mxu0
        %620 = vdwg.mxu0
        %v621 = vsel %vm455, %v618, -inf
        %622 = vmax.xlane.f32.xlu0 %v621
        %v623 = vpop.xlane.xlu0 %622
        %v624 = vsub.f32 %v618, %v623
        %v625 = vmul.f32 %v624, 1.442695
        %v626 = vpow.pop %v625
        %v627 = vsel %vm455, %v626, 0.0
        %628 = vadd.xlane.f32.xlu0 %v627
        %v629 = vpop.xlane.xlu0 %628
        %v630 = vrcp.pop %v629
        %v631 = vmul.f32 %v626, %v630
        %632 = vrot.lane.b32.xlu0 %v372, 48
        %v633 = vpop.permute.xlu0 %632
        %v636 = vsel %vm455, %v631, 0
        %638 = vmatprep.subr.mxu0 0.0
        %639 = vmatpush1.msra.mxu0 0.0
        %640 = vmatprep.subr.mxu0 0.0
        %641 = vmatpush1.msra.mxu0 0.0
        %642 = vmatprep.subr.mxu0 0.0
        %643 = vmatpush1.msra.mxu0 0.0
        %644 = vmatprep.subr.mxu0 0.0
        %645 = vmatpush1.msra.mxu0 0.0
        %646 = vmatprep.subr.mxu0 0.0
        %647 = vmatpush1.msra.mxu0 0.0
        %648 = vmatprep.subr.mxu0 0.0
        %649 = vmatpush1.msra.mxu0 0.0
        %650 = vmatprep.subr.mxu0 0.0
        %651 = vmatpush1.msra.mxu0 0.0
        %652 = vmatprep.subr.mxu0 0.0
        %653 = vmatpush1.msra.mxu0 0.0
        %654 = vmatprep.subr.mxu0 0.0
        %655 = vmatpush1.msra.mxu0 0.0
        %656 = vmatprep.subr.mxu0 0.0
        %657 = vmatpush1.msra.mxu0 0.0
        %658 = vmatprep.subr.mxu0 0.0
        %659 = vmatpush1.msra.mxu0 0.0
        %660 = vmatprep.subr.mxu0 0.0
        %661 = vmatpush1.msra.mxu0 0.0
        %662 = vmatprep.subr.mxu0 0.0
        %663 = vmatpush1.msra.mxu0 0.0
        %664 = vmatprep.subr.mxu0 0.0
        %665 = vmatpush1.msra.mxu0 0.0
        %666 = vmatprep.subr.mxu0 0.0
        %667 = vmatpush1.msra.mxu0 0.0
        %668 = vmatprep.subr.mxu0 0.0
        %669 = vmatpush1.msra.mxu0 %v633
        %670 = vmatprep.subr.mxu0 0.0
        %671 = vmatpush2.msra.mxu0 0.0
        %672 = vmatprep.subr.mxu0 0.0
        %673 = vmatpush2.msra.mxu0 0.0
        %674 = vmatprep.subr.mxu0 0.0
        %675 = vmatpush2.msra.mxu0 0.0
        %676 = vmatprep.subr.mxu0 0.0
        %677 = vmatpush2.msra.mxu0 0.0
        %678 = vmatprep.subr.mxu0 0.0
        %679 = vmatpush2.msra.mxu0 0.0
        %680 = vmatprep.subr.mxu0 0.0
        %681 = vmatpush2.msra.mxu0 0.0
        %682 = vmatprep.subr.mxu0 0.0
        %683 = vmatpush2.msra.mxu0 0.0
        %684 = vmatprep.subr.mxu0 0.0
        %685 = vmatpush2.msra.mxu0 0.0
        %686 = vmatprep.subr.mxu0 0.0
        %687 = vmatpush2.msra.mxu0 0.0
        %688 = vmatprep.subr.mxu0 0.0
        %689 = vmatpush2.msra.mxu0 0.0
        %690 = vmatprep.subr.mxu0 0.0
        %691 = vmatpush2.msra.mxu0 0.0
        %692 = vmatprep.subr.mxu0 0.0
        %693 = vmatpush2.msra.mxu0 0.0
        %694 = vmatprep.subr.mxu0 0.0
        %695 = vmatpush2.msra.mxu0 0.0
        %696 = vmatprep.subr.mxu0 0.0
        %697 = vmatpush2.msra.mxu0 0.0
        %698 = vmatprep.subr.mxu0 0.0
        %699 = vmatpush2.msra.mxu0 0.0
        %700 = vmatprep.subr.mxu0 0.0
        %701 = vmatpush2.msra.mxu0 0.0
        %702 = vmatprep.mubr.f32.mxu0 0.0
        %703 = vmatmul.mubr.f32.gmra.mxu0 %v636
        %v704 = vpop.f32.mrf.mxu0
        %v705 = vadd.f32 0.0, %v704
        %v706 = vpop.f32.mrf.mxu0
        %707 = vdwg.mxu0
        %709 = vrot.lane.b32.xlu0 %v705, 16
        %v710 = vpop.permute.xlu0 %709
        %v712 = vsel %vm379, %v540, %v710
        %713 = vst.msk [vmem:[%s258] sm:$0xff] %vm269, %v712
        %714 = vst.msk [vmem:[%s265] sm:$0xff] %vm455, %v466
        %715 = vst.msk [vmem:[%s265 + $0x8] sm:$0xff] %vm455, %v631
        %s716 = sand.u32 %s124, 1
        %s717 = scalar_lea.sflag [#allocation4], %s716
        %s718 = sand.u32 %s124, 1
        %s719 = smul.addr %s718, 8
        %s720 = scalar_lea.vmem [#allocation7], %s719
        %s721 = sand.u32 %s150, 1
        %s722 = scalar_lea.sflag [#allocation9], %s721
        %s723 = sand.u32 %s150, 1
        %s724 = smul.addr %s723, 16
        %s725 = scalar_lea.vmem [#allocation8], %s724
        // Predicated region
        $region45: #{tpu_custom_call.1} parent=35 // pred_check
          %p726 = pneg %p134
        $region46: #{tpu_custom_call.1} parent=35 // pred_check_branch
          %728 = sbr.rel (%p726) target = $region48
        $region47: #{tpu_custom_call.1} parent=35 // pred_region
          %s730 = ssub.s32 128, 128
          %731 = vsyncadd %s717, %s730
          %s732 = smul.addr %s27, 128
          %s733 = scalar_lea.hbm %s4, %s732
          %s735 = sshll.u32 %s720, 4
          %s736 = int_to_ptr.vmem [resolvable:$true] %s735
          %738 = dma.vmem_to_hbm [thread:$0]  %s736, 128, %s733, %s717
        $region48: #{tpu_custom_call.1} parent=35 // pred_fallthru
          _
        // Predicated region
        $region49: #{tpu_custom_call.1} parent=35 // pred_check
          %p739 = pneg %p160
        $region50: #{tpu_custom_call.1} parent=35 // pred_check_branch
          %741 = sbr.rel (%p739) target = $region52
        $region51: #{tpu_custom_call.1} parent=35 // pred_region
          %s743 = ssub.s32 256, 256
          %744 = vsyncadd %s722, %s743
          %s745 = smul.addr %s27, 2
          %s746 = smul.addr %s745, 128
          %s747 = scalar_lea.hbm %s5, %s746
          %s748 = sshll.u32 %s725, 4
          %s749 = int_to_ptr.vmem [resolvable:$true] %s748
          %754 = dma.vmem_to_hbm [thread:$0]  %s749, 256, %s747, %s722, 128, 128, 8
        $region52: #{tpu_custom_call.1} parent=35 // pred_fallthru
          _
      $region36: #{tpu_custom_call.1} parent=5 // pred_fallthru
        _
      %p755 = scmp.le.s32.totalorder 2, %s22
      // Predicated region
      $region53: #{tpu_custom_call.1} parent=5 // pred_check
        %p756 = pneg %p755
      $region54: #{tpu_custom_call.1} parent=5 // pred_check_branch
        %758 = sbr.rel (%p756) target = $region56
      $region55: #{tpu_custom_call.1} parent=5 // pred_region
        %s759 = ssub.s32 %s22, 2
        // Predicated region
        $region57: #{tpu_custom_call.1} parent=55 // pred_check
          %p760 = pneg %p140
        $region58: #{tpu_custom_call.1} parent=55 // pred_check_branch
          %762 = sbr.rel (%p760) target = $region60
        $region59: #{tpu_custom_call.1} parent=55 // pred_region
          %s763 = sand.u32 %s125, 1
          %s764 = scalar_lea.sflag [#allocation4], %s763
          %s765 = sand.u32 %s125, 1
          %s766 = smul.addr %s765, 8
          %s767 = scalar_lea.vmem [#allocation7], %s766
          %768 = dma.done %s764, 128
        $region60: #{tpu_custom_call.1} parent=55 // pred_fallthru
          _
        // Predicated region
        $region61: #{tpu_custom_call.1} parent=55 // pred_check
          %p769 = pneg %p166
        $region62: #{tpu_custom_call.1} parent=55 // pred_check_branch
          %771 = sbr.rel (%p769) target = $region64
        $region63: #{tpu_custom_call.1} parent=55 // pred_region
          %s772 = sand.u32 %s151, 1
          %s773 = scalar_lea.sflag [#allocation9], %s772
          %s774 = sand.u32 %s151, 1
          %s775 = smul.addr %s774, 16
          %s776 = scalar_lea.vmem [#allocation8], %s775
          %777 = dma.done %s773, 256
        $region64: #{tpu_custom_call.1} parent=55 // pred_fallthru
          _
      $region56: #{tpu_custom_call.1} parent=5 // pred_fallthru
        _
    $region6: #{tpu_custom_call.1} parent=1 // loop_footer
      %s26 = sadd.s32 1, %s22
    $region7: #{tpu_custom_call.1} parent=1 // loop_footer_branch
      %21 = sbr.rel target = $region3
    $region8: #{tpu_custom_call.1} parent=1 // loop_exit
      _
    %778 = vsyncpa [#allocation3], 1
    %s779 = scalar_lea.sflag [#allocation3], 1
    %780 = vsyncpa %s779, 1
    %781 = vsyncpa [#allocation6], 1
    %782 = vsyncpa [#allocation4], 1
    %s783 = scalar_lea.sflag [#allocation4], 1
    %784 = vsyncpa %s783, 1
    %785 = vsyncpa [#allocation9], 1
    %s786 = scalar_lea.sflag [#allocation9], 1
    %787 = vsyncpa %s786, 1

</llo_original>
